<compile_context>
chip_gen: v7x
topology: tpu7x:2x2x1
jax: 0.10.0
libtpu: 0.0.40
codegen_flags: <defaults>
</compile_context>

<pallas_src>
import functools

import jax
import jax.numpy as jnp
from jax.experimental import pallas as pl
from jax.experimental.pallas import tpu as pltpu

MANIFOLD_DIM = 3
HIDDEN_DIM = 16


# ----------------------------------------------------------------------------
# Deterministic parameter init (mirrors nn.init.orthogonal_ + nn.init.zeros_)
# ----------------------------------------------------------------------------
def _orthogonal(key, rows, cols):
    """Orthogonal init like torch.nn.init.orthogonal_ for a (rows, cols) weight."""
    flat_rows, flat_cols = (rows, cols) if rows >= cols else (cols, rows)
    a = jax.random.normal(key, (flat_rows, flat_cols), dtype=jnp.float32)
    q, r = jnp.linalg.qr(a)
    d = jnp.sign(jnp.diagonal(r))
    q = q * d[None, :]
    if rows < cols:
        q = q.T
    return q[:rows, :cols]


def init_params(key):
    k_in, k_out = jax.random.split(key, 2)
    # torch weight layout: input_proj.weight (hidden, manifold), output_proj.weight (manifold, hidden)
    w_in = _orthogonal(k_in, HIDDEN_DIM, MANIFOLD_DIM)    # (16, 3)
    w_out = _orthogonal(k_out, MANIFOLD_DIM, HIDDEN_DIM)  # (3, 16)
    return {
        "w_in": jnp.asarray(w_in, jnp.float32),           # (16, 3)
        "b_in": jnp.zeros((HIDDEN_DIM,), jnp.float32),    # zeros_ init
        "w_out": jnp.asarray(w_out, jnp.float32),         # (3, 16)
        "b_out": jnp.zeros((MANIFOLD_DIM,), jnp.float32),
    }


# ----------------------------------------------------------------------------
# Generation detection + tile choice (best-effort, conservative on failure)
# ----------------------------------------------------------------------------
@functools.lru_cache(maxsize=None)
def _tpu_arch():
    """Returns (num_tensorcores, vmem_capacity_bytes); conservative fallback."""
    vmem_cap = 128 * 1024 * 1024
    kind = ""
    try:
        vmem_cap = int(getattr(pltpu.get_tpu_info(), "vmem_capacity_bytes", vmem_cap))
    except Exception:
        pass
    try:
        kind = jax.devices()[0].device_kind.lower()
    except Exception:
        pass
    # v7x: 2 TensorCores / 64 MiB VMEM per TC; v5e/v6e: 1 TC / 128 MiB.
    num_tc = 2 if ("v7" in kind or vmem_cap <= 64 * 1024 * 1024) else 1
    return num_tc, vmem_cap


def _choose_tile(m):
    """Pick a lane-dense column tile (multiple of 128) and a VMEM budget.

    Pipeline VMEM per step: (3, tn) blocks pad to 8 sublanes -> 32*tn bytes per buffer;
    double-buffered in + out -> ~128*tn bytes total."""
    num_tc, _ = _tpu_arch()
    if num_tc >= 2:
        # v7x-like: keep >= 2 grid steps per TensorCore; 262144 cols -> ~32 MiB pipeline VMEM.
        max_tn, target_steps, vmem_limit = 262144, 2 * num_tc, 48 * 1024 * 1024
    else:
        # Single-TC v5e/v6e: just enough steps to pipeline; 131072 cols -> ~16 MiB pipeline VMEM.
        max_tn, target_steps, vmem_limit = 131072, 2, 32 * 1024 * 1024
    tn = -(-m // target_steps)            # ceil(m / target_steps)
    tn = ((tn + 127) // 128) * 128        # round up to a multiple of 128 lanes
    tn = max(512, min(max_tn, tn))
    return tn, vmem_limit


# ----------------------------------------------------------------------------
# Pallas kernel: folded input_proj∘output_proj as VPU broadcast-MACs on lane-dense rows.
# ----------------------------------------------------------------------------
def pattern_processor_kernel(w_ref, b_ref, xt_ref, ot_ref):
    # w_ref: (3, 3) folded weight in SMEM; b_ref: (3,) folded bias in SMEM.
    # Computes out^T = W_fold @ x^T + b_fold on a (3, tn) lane-dense slab using the VPU
    # (a 3x3 matmul would waste an MXU push + MRF-pop round trip).
    # TODO(synk): pattern_bundle.bundle_projection, riemannian.compute_metric, quantum_bridge
    # (neural_to_quantum / evolve_quantum_state / quantum_to_neural), flow.flow_step,
    # pattern_dynamics.evolve and pattern_formation.evolve are external submodules whose code
    # is not provided; treated as identity passthrough (which is what makes the fold valid).
    x0 = xt_ref[0:1, :]
    x1 = xt_ref[1:2, :]
    x2 = xt_ref[2:3, :]
    ot_ref[0:1, :] = w_ref[0, 0] * x0 + w_ref[0, 1] * x1 + w_ref[0, 2] * x2 + b_ref[0]
    ot_ref[1:2, :] = w_ref[1, 0] * x0 + w_ref[1, 1] * x1 + w_ref[1, 2] * x2 + b_ref[1]
    ot_ref[2:3, :] = w_ref[2, 0] * x0 + w_ref[2, 1] * x1 + w_ref[2, 2] * x2 + b_ref[2]


@jax.jit
def pattern_processor_forward(x, params):
    """x: (batch, seq, manifold_dim) float32 -> (batch, seq, manifold_dim) float32."""
    batch, seq, d = x.shape
    assert d == MANIFOLD_DIM
    m = batch * seq

    # Fold the two projections (valid while the external submodules are identity):
    #   out = W_out (W_in x + b_in) + b_out = W_fold x + b_fold
    w_fold = params["w_out"] @ params["w_in"]                    # (3, 3)
    b_fold = params["w_out"] @ params["b_in"] + params["b_out"]  # (3,)  (zeros with default init)

    tn, vmem_limit = _choose_tile(m)
    n_pad = -(-m // tn) * tn
    grid = (n_pad // tn,)

    # Lane-dense presentation: pad rows FIRST, then transpose, so XLA emits one relayout pass
    # into (3, n_pad) instead of materializing (3, m) and re-padding it.
    x2d = x.reshape(m, d)
    if n_pad != m:
        x2d = jnp.pad(x2d, ((0, n_pad - m), (0, 0)))             # zero tail rows
    xt = x2d.T                                                   # (3, n_pad), lane-dense

    out_t = pl.pallas_call(
        pattern_processor_kernel,
        out_shape=jax.ShapeDtypeStruct((MANIFOLD_DIM, n_pad), jnp.float32),
        grid=grid,
        in_specs=[
            pl.BlockSpec(memory_space=pltpu.MemorySpace.SMEM),         # W_fold (3,3) scalars
            pl.BlockSpec(memory_space=pltpu.MemorySpace.SMEM),         # b_fold (3,)  scalars
            pl.BlockSpec((MANIFOLD_DIM, tn), lambda i: (0, i)),        # x^T slab (lane-dense)
        ],
        out_specs=pl.BlockSpec((MANIFOLD_DIM, tn), lambda i: (0, i)),  # out^T slab (lane-dense)
        compiler_params=pltpu.CompilerParams(
            # TODO(synk): profile on v7x; if one TensorCore idles, switch to an explicit
            # leading core axis (grid=(2, n/2)) rather than relying on "parallel".
            dimension_semantics=("parallel",),
            vmem_limit_bytes=vmem_limit,
        ),
    )(w_fold, b_fold, xt)

    # Drop the zero tail and return to the original (batch, seq, manifold_dim) layout.
    return out_t[:, :m].T.reshape(batch, seq, MANIFOLD_DIM)


def pattern_processor_reference(x, params):
    """Pure-JAX reference of the same (defined) forward path."""
    h = x @ params["w_in"].T + params["b_in"]
    return h @ params["w_out"].T + params["b_out"]


if __name__ == "__main__":
    key = jax.random.PRNGKey(0)
    k_param, k_x = jax.random.split(key)
    params = init_params(k_param)

    batch, seq = 2, 8
    x = jax.random.normal(k_x, (batch, seq, MANIFOLD_DIM), dtype=jnp.float32)

    out = pattern_processor_forward(x, params)
    out = jax.block_until_ready(out)

    ref = pattern_processor_reference(x, params)
    assert out.shape == (batch, seq, MANIFOLD_DIM)
    assert jnp.allclose(out, ref, atol=1e-5, rtol=1e-5), "Pallas kernel mismatch vs JAX reference"

    print("KERNEL_OK")
</pallas_src>

<mosaic_0001>
module attributes {stable_mosaic.version = 11 : i64} {
  func.func @pattern_processor_kernel(%arg0: i32, %arg1: memref<3x3xf32, #tpu.memory_space<smem>>, %arg2: memref<3xf32, #tpu.memory_space<smem>>, %arg3: memref<3x512xf32, #tpu.memory_space<vmem>>, %arg4: memref<3x512xf32, #tpu.memory_space<vmem>>) attributes {dimension_semantics = [#tpu.dimension_semantics<parallel>], iteration_bounds = array<i64: 1>, scalar_prefetch = 0 : i64, scratch_operands = 0 : i64, tpu.core_type = #tpu.core_type<tc>, window_params = [{transform_indices = @transform_0, window_bounds = array<i64: 3, 3>}, {transform_indices = @transform_1, window_bounds = array<i64: 3>}, {transform_indices = @transform_2, window_bounds = array<i64: 3, 512>}, {transform_indices = @transform_3, window_bounds = array<i64: 3, 512>}]} {
    %c0 = arith.constant 0 : index
    %c0_0 = arith.constant 0 : index
    %0 = vector.load %arg3[%c0, %c0_0] : memref<3x512xf32, #tpu.memory_space<vmem>>, vector<1x512xf32>
    %c1 = arith.constant 1 : index
    %c0_1 = arith.constant 0 : index
    %1 = vector.load %arg3[%c1, %c0_1] : memref<3x512xf32, #tpu.memory_space<vmem>>, vector<1x512xf32>
    %c2 = arith.constant 2 : index
    %c0_2 = arith.constant 0 : index
    %2 = vector.load %arg3[%c2, %c0_2] : memref<3x512xf32, #tpu.memory_space<vmem>>, vector<1x512xf32>
    %c0_3 = arith.constant 0 : index
    %c0_4 = arith.constant 0 : index
    %3 = memref.load %arg1[%c0_3, %c0_4] : memref<3x3xf32, #tpu.memory_space<smem>>
    %4 = vector.broadcast %3 : f32 to vector<1x512xf32>
    %5 = arith.mulf %4, %0 : vector<1x512xf32>
    %c0_5 = arith.constant 0 : index
    %c1_6 = arith.constant 1 : index
    %6 = memref.load %arg1[%c0_5, %c1_6] : memref<3x3xf32, #tpu.memory_space<smem>>
    %7 = vector.broadcast %6 : f32 to vector<1x512xf32>
    %8 = arith.mulf %7, %1 : vector<1x512xf32>
    %9 = arith.addf %5, %8 : vector<1x512xf32>
    %c0_7 = arith.constant 0 : index
    %c2_8 = arith.constant 2 : index
    %10 = memref.load %arg1[%c0_7, %c2_8] : memref<3x3xf32, #tpu.memory_space<smem>>
    %11 = vector.broadcast %10 : f32 to vector<1x512xf32>
    %12 = arith.mulf %11, %2 : vector<1x512xf32>
    %13 = arith.addf %9, %12 : vector<1x512xf32>
    %c0_9 = arith.constant 0 : index
    %14 = memref.load %arg2[%c0_9] : memref<3xf32, #tpu.memory_space<smem>>
    %15 = vector.broadcast %14 : f32 to vector<1x512xf32>
    %16 = arith.addf %13, %15 : vector<1x512xf32>
    %c0_10 = arith.constant 0 : index
    %c0_11 = arith.constant 0 : index
    %17 = vector.load %arg4[%c0_10, %c0_11] : memref<3x512xf32, #tpu.memory_space<vmem>>, vector<1x512xf32>
    tpu.vector_store %arg4[%c0_10, %c0_11], %16 {strides = array<i32>} : memref<3x512xf32, #tpu.memory_space<vmem>>, vector<1x512xf32>,
    %c1_12 = arith.constant 1 : index
    %c0_13 = arith.constant 0 : index
    %18 = memref.load %arg1[%c1_12, %c0_13] : memref<3x3xf32, #tpu.memory_space<smem>>
    %19 = vector.broadcast %18 : f32 to vector<1x512xf32>
    %20 = arith.mulf %19, %0 : vector<1x512xf32>
    %c1_14 = arith.constant 1 : index
    %c1_15 = arith.constant 1 : index
    %21 = memref.load %arg1[%c1_14, %c1_15] : memref<3x3xf32, #tpu.memory_space<smem>>
    %22 = vector.broadcast %21 : f32 to vector<1x512xf32>
    %23 = arith.mulf %22, %1 : vector<1x512xf32>
    %24 = arith.addf %20, %23 : vector<1x512xf32>
    %c1_16 = arith.constant 1 : index
    %c2_17 = arith.constant 2 : index
    %25 = memref.load %arg1[%c1_16, %c2_17] : memref<3x3xf32, #tpu.memory_space<smem>>
    %26 = vector.broadcast %25 : f32 to vector<1x512xf32>
    %27 = arith.mulf %26, %2 : vector<1x512xf32>
    %28 = arith.addf %24, %27 : vector<1x512xf32>
    %c1_18 = arith.constant 1 : index
    %29 = memref.load %arg2[%c1_18] : memref<3xf32, #tpu.memory_space<smem>>
    %30 = vector.broadcast %29 : f32 to vector<1x512xf32>
    %31 = arith.addf %28, %30 : vector<1x512xf32>
    %c1_19 = arith.constant 1 : index
    %c0_20 = arith.constant 0 : index
    %32 = vector.load %arg4[%c1_19, %c0_20] : memref<3x512xf32, #tpu.memory_space<vmem>>, vector<1x512xf32>
    tpu.vector_store %arg4[%c1_19, %c0_20], %31 {strides = array<i32>} : memref<3x512xf32, #tpu.memory_space<vmem>>, vector<1x512xf32>,
    %c2_21 = arith.constant 2 : index
    %c0_22 = arith.constant 0 : index
    %33 = memref.load %arg1[%c2_21, %c0_22] : memref<3x3xf32, #tpu.memory_space<smem>>
    %34 = vector.broadcast %33 : f32 to vector<1x512xf32>
    %35 = arith.mulf %34, %0 : vector<1x512xf32>
    %c2_23 = arith.constant 2 : index
    %c1_24 = arith.constant 1 : index
    %36 = memref.load %arg1[%c2_23, %c1_24] : memref<3x3xf32, #tpu.memory_space<smem>>
    %37 = vector.broadcast %36 : f32 to vector<1x512xf32>
    %38 = arith.mulf %37, %1 : vector<1x512xf32>
    %39 = arith.addf %35, %38 : vector<1x512xf32>
    %c2_25 = arith.constant 2 : index
    %c2_26 = arith.constant 2 : index
    %40 = memref.load %arg1[%c2_25, %c2_26] : memref<3x3xf32, #tpu.memory_space<smem>>
    %41 = vector.broadcast %40 : f32 to vector<1x512xf32>
    %42 = arith.mulf %41, %2 : vector<1x512xf32>
    %43 = arith.addf %39, %42 : vector<1x512xf32>
    %c2_27 = arith.constant 2 : index
    %44 = memref.load %arg2[%c2_27] : memref<3xf32, #tpu.memory_space<smem>>
    %45 = vector.broadcast %44 : f32 to vector<1x512xf32>
    %46 = arith.addf %43, %45 : vector<1x512xf32>
    %c2_28 = arith.constant 2 : index
    %c0_29 = arith.constant 0 : index
    %47 = vector.load %arg4[%c2_28, %c0_29] : memref<3x512xf32, #tpu.memory_space<vmem>>, vector<1x512xf32>
    tpu.vector_store %arg4[%c2_28, %c0_29], %46 {strides = array<i32>} : memref<3x512xf32, #tpu.memory_space<vmem>>, vector<1x512xf32>,
    return
  }
  func.func @transform_0(%arg0: i32) -> (i32, i32) {
    %c0_i32 = arith.constant 0 : i32
    %c0_i32_0 = arith.constant 0 : i32
    %c0_i32_1 = arith.constant 0 : i32
    return %c0_i32, %c0_i32_0 : i32, i32
  }
  func.func @transform_1(%arg0: i32) -> i32 {
    %c0_i32 = arith.constant 0 : i32
    %c0_i32_0 = arith.constant 0 : i32
    return %c0_i32 : i32
  }
  func.func @transform_2(%arg0: i32) -> (i32, i32) {
    %c0_i32 = arith.constant 0 : i32
    %c0_i32_0 = arith.constant 0 : i32
    return %c0_i32, %arg0 : i32, i32
  }
  func.func @transform_3(%arg0: i32) -> (i32, i32) {
    %c0_i32 = arith.constant 0 : i32
    %c0_i32_0 = arith.constant 0 : i32
    return %c0_i32, %arg0 : i32, i32
  }
}

</mosaic_0001>

<llo_original>
// kernel: pattern_processor_forward.1
$region0: #{pattern_processor_forward.1}
  #allocation0 [shape = 'u32[]', space=smem, size = 0x4, offset = 0x4, fixed_abs, tag = 'smem constant byte address 0x4 - core index']
  #allocation1 [shape = 'u32[144,128]{1,0:T(1,128)}', space=vmem, size = 0x12000, scoped, tag = 'internal scratch']
  %s0 = inlined_call_operand.vmem [shape: f32[3,3], index: 0, kind: input, shape index: {}]
  %s1 = inlined_call_operand.vmem [shape: f32[3], index: 1, kind: input, shape index: {}]
  %s2 = inlined_call_operand.vmem [shape: f32[3,512], index: 2, kind: input, shape index: {}]
  %s3 = inlined_call_operand.vmem [shape: f32[3,512], index: 3, kind: output, shape index: {}]
  %s4 = sld [smem:[#allocation0]]
  $region30: #{pattern_processor_forward.1} parent=0
    _
  %s6 = ssub.s32 1, %s4
  %s7 = scalar_select 0, %s6, %s4
  $region1: #{pattern_processor_forward.1} parent=0
    #allocation2 [shape = 'u8[2048]{0}', space=smem, size = 0x800, scoped, tag = 'input window, operand 0, single buffered']
    #allocation3 [shape = 's32[1]{0}', space=sflag, size = 0x4, scoped, tag = 'scoped memory for pattern_processor_forward.1']
    #allocation4 [shape = 'u8[512]{0}', space=smem, size = 0x200, scoped, tag = 'input window, operand 1, single buffered']
    #allocation5 [shape = 's32[1]{0}', space=sflag, size = 0x4, scoped, tag = 'scoped memory for pattern_processor_forward.1']
    %8 = vsyncpa [#allocation3], 0
    %9 = vsyncpa [#allocation5], 0
    // Predicated region
    $region2: #{pattern_processor_forward.1} parent=1 // pred_check
      _
    $region3: #{pattern_processor_forward.1} parent=1 // pred_check_branch
      %11 = sbr.rel (0) target = $region5
    $region4: #{pattern_processor_forward.1} parent=1 // pred_region
      %s13 = ssub.s32 64, 64
      %14 = vsyncadd [#allocation3], %s13
      %s16 = sshll.u32 %s0, 4
      %s17 = int_to_ptr.vmem [resolvable:$true] %s16
      %19 = dma.vmem_to_smem %s17, 64, [#allocation2], [#allocation3]
    $region5: #{pattern_processor_forward.1} parent=1 // pred_fallthru
      _
    // Predicated region
    $region6: #{pattern_processor_forward.1} parent=1 // pred_check
      _
    $region7: #{pattern_processor_forward.1} parent=1 // pred_check_branch
      %21 = sbr.rel (0) target = $region9
    $region8: #{pattern_processor_forward.1} parent=1 // pred_region
      %s23 = ssub.s32 16, 16
      %24 = vsyncadd [#allocation5], %s23
      %s26 = sshll.u32 %s1, 4
      %s27 = int_to_ptr.vmem [resolvable:$true] %s26
      %29 = dma.vmem_to_smem %s27, 16, [#allocation4], [#allocation5]
    $region9: #{pattern_processor_forward.1} parent=1 // pred_fallthru
      _
    // Predicated region
    $region10: #{pattern_processor_forward.1} parent=1 // pred_check
      _
    $region11: #{pattern_processor_forward.1} parent=1 // pred_check_branch
      %31 = sbr.rel (0) target = $region13
    $region12: #{pattern_processor_forward.1} parent=1 // pred_region
      _
    $region13: #{pattern_processor_forward.1} parent=1 // pred_fallthru
      _
    // Predicated region
    $region14: #{pattern_processor_forward.1} parent=1 // pred_check
      _
    $region15: #{pattern_processor_forward.1} parent=1 // pred_check_branch
      %33 = sbr.rel (0) target = $region17
    $region16: #{pattern_processor_forward.1} parent=1 // pred_region
      %34 = dma.done [#allocation3], 64
    $region17: #{pattern_processor_forward.1} parent=1 // pred_fallthru
      _
    // Predicated region
    $region18: #{pattern_processor_forward.1} parent=1 // pred_check
      _
    $region19: #{pattern_processor_forward.1} parent=1 // pred_check_branch
      %36 = sbr.rel (0) target = $region21
    $region20: #{pattern_processor_forward.1} parent=1 // pred_region
      %37 = dma.done [#allocation5], 16
    $region21: #{pattern_processor_forward.1} parent=1 // pred_fallthru
      _
    %38 = sfence
    %v39 = vld [vmem:[%s2] ss:$4 sm:$0xf]
    %s40 = scalar_lea.vmem %s2, 1
    %v41 = vld [vmem:[%s40] ss:$4 sm:$0xf]
    %s42 = scalar_lea.vmem %s2, 2
    %v43 = vld [vmem:[%s42] ss:$4 sm:$0xf]
    %s44 = sld [smem:[#allocation2]]
    %v45 = vstv %s44
    %v46 = vmul.f32 %v45, %v39
    %s47 = sld [smem:[#allocation2 + $0x1]]
    %v48 = vstv %s47
    %v49 = vmul.f32 %v48, %v41
    %v50 = vadd.f32 %v46, %v49
    %s51 = sld [smem:[#allocation2 + $0x2]]
    %v52 = vstv %s51
    %v53 = vmul.f32 %v52, %v43
    %v54 = vadd.f32 %v50, %v53
    %s55 = sld [smem:[#allocation4]]
    %v56 = vstv %s55
    %v57 = vadd.f32 %v54, %v56
    %v58 = vlaneseq
    %vm59 = vcmp.ge.s32.totalorder %v58, 0
    %vm60 = vcmp.lt.s32.totalorder %v58, 512
    %vm61 = vmand %vm59, %vm60
    %62 = vst.msk [vmem:[%s3] ss:$4 sm:$0xf] %vm61, %v57
    %s63 = sld [smem:[#allocation2 + $0x80]]
    %v64 = vstv %s63
    %v65 = vmul.f32 %v64, %v39
    %s66 = sld [smem:[#allocation2 + $0x81]]
    %v67 = vstv %s66
    %v68 = vmul.f32 %v67, %v41
    %v69 = vadd.f32 %v65, %v68
    %s70 = sld [smem:[#allocation2 + $0x82]]
    %v71 = vstv %s70
    %v72 = vmul.f32 %v71, %v43
    %v73 = vadd.f32 %v69, %v72
    %s74 = sld [smem:[#allocation4 + $0x1]]
    %v75 = vstv %s74
    %v76 = vadd.f32 %v73, %v75
    %s77 = scalar_lea.vmem %s3, 1
    %78 = vst.msk [vmem:[%s77] ss:$4 sm:$0xf] %vm61, %v76
    %s79 = sld [smem:[#allocation2 + $0x100]]
    %v80 = vstv %s79
    %v81 = vmul.f32 %v80, %v39
    %s82 = sld [smem:[#allocation2 + $0x101]]
    %v83 = vstv %s82
    %v84 = vmul.f32 %v83, %v41
    %v85 = vadd.f32 %v81, %v84
    %s86 = sld [smem:[#allocation2 + $0x102]]
    %v87 = vstv %s86
    %v88 = vmul.f32 %v87, %v43
    %v89 = vadd.f32 %v85, %v88
    %s90 = sld [smem:[#allocation4 + $0x2]]
    %v91 = vstv %s90
    %v92 = vadd.f32 %v89, %v91
    %s93 = scalar_lea.vmem %s3, 2
    %94 = vst.msk [vmem:[%s93] ss:$4 sm:$0xf] %vm61, %v92
    // Predicated region
    $region22: #{pattern_processor_forward.1} parent=1 // pred_check
      _
    $region23: #{pattern_processor_forward.1} parent=1 // pred_check_branch
      %96 = sbr.rel (0) target = $region25
    $region24: #{pattern_processor_forward.1} parent=1 // pred_region
      _
    $region25: #{pattern_processor_forward.1} parent=1 // pred_fallthru
      _
    // Predicated region
    $region26: #{pattern_processor_forward.1} parent=1 // pred_check
      _
    $region27: #{pattern_processor_forward.1} parent=1 // pred_check_branch
      %98 = sbr.rel (0) target = $region29
    $region28: #{pattern_processor_forward.1} parent=1 // pred_region
      _
    $region29: #{pattern_processor_forward.1} parent=1 // pred_fallthru
      _
    %99 = vsyncpa [#allocation3], 1
    %100 = vsyncpa [#allocation5], 1

</llo_original>
